<compile_context>
chip_gen: v7x
topology: tpu7x:2x2x1
jax: 0.10.0
libtpu: 0.0.40
codegen_flags: <defaults>
</compile_context>

<pallas_src>
from functools import partial

import jax
import jax.numpy as jnp
from jax.experimental import pallas as pl
from jax.experimental.pallas import tpu as pltpu


def _round_up(x, m):
    return ((x + m - 1) // m) * m


def _proj_kernel(x_ref, w_ref, b_ref, o_ref):
    # x_ref: (tm, Kp) compute_dtype | w_ref: (Kp, Ep) compute_dtype
    # b_ref: (1, Ep) f32            | o_ref: (tm, Ep) f32
    # MXU matmul with f32 accumulation; bias add in f32.
    acc = jnp.dot(x_ref[...], w_ref[...], preferred_element_type=jnp.float32)
    o_ref[...] = (acc + b_ref[...]).astype(o_ref.dtype)


def pack_linear_params(weight, bias, compute_dtype=jnp.bfloat16):
    """One-time packing of torch-layout Linear params.

    weight: (E, K) -> transposed + zero-padded (Kp, Ep) in compute_dtype
    bias:   (E,)   -> zero-padded (1, Ep) f32
    Kp, Ep are multiples of 128 (lane-dense loads/stores). If E/K are already
    multiples of 128 nothing is padded.
    """
    E, K = weight.shape
    Kp = _round_up(K, 128)
    Ep = _round_up(E, 128)
    w2d = jnp.transpose(weight)                                  # (K, E)
    w2d = jnp.pad(w2d, ((0, Kp - K), (0, Ep - E))).astype(compute_dtype)
    b2d = jnp.pad(bias.astype(jnp.float32), (0, Ep - E)).reshape(1, Ep)
    return w2d, b2d


def _choose_tm(Mp, Kp, Ep, in_itemsize, w_itemsize):
    """Pick the row tile.

    Largest tile (<=2048) to amortize per-step pipeline overhead, subject to:
      (a) >=2 grid steps when Mp allows it, so the 'parallel' M axis can shard
          across both v7x TensorCores;
      (b) double-buffered tile bytes staying under a ~40 MiB budget that is
          safe on v7x's 64 MiB VMEM (v5e/v6e have 128 MiB of headroom).
    Returns (tm, tile_bytes(tm)).  Mp must be a multiple of 8.
    """
    tm = min(2048, Mp)
    if Mp >= 16:
        tm = min(tm, _round_up(pl.cdiv(Mp, 2), 8))

    def tile_bytes(t):
        # 2x input tile (double-buffered) + 2x f32 output tile + resident W/b.
        return (2 * t * Kp * in_itemsize + 2 * t * Ep * 4
                + Kp * Ep * w_itemsize + 2 * Ep * 4)

    while tm > 8 and tile_bytes(tm) > 40 * 1024 * 1024:
        tm = max(8, _round_up(tm // 2, 8))
    return tm, tile_bytes(tm)


@partial(jax.jit, static_argnames=("patch_size", "emb_size", "compute_dtype"))
def patch_embedding_forward(x, w_packed, b_packed, patch_size, emb_size,
                            compute_dtype=jnp.bfloat16):
    """x: (B, C, H, W). Returns (B, N, emb_size) float32 (parameter dtype)."""
    B, C, H, W = x.shape
    p = patch_size
    nH, nW = H // p, W // p
    N = nH * nW
    M = B * N
    K = C * p * p
    Kp, Ep = w_packed.shape

    # Patch extraction (torch unfold drops the spatial remainder).  Under jit
    # the slice + compute_dtype cast + pad below fuse into the one transpose
    # copy XLA emits, so the input is materialized in HBM exactly once (bf16).
    # TODO(synk): fold the patch gather into the kernel itself with a
    # (B, nH, M-tile) grid over the NCHW array to remove even that copy.
    xb = x[:, :, : nH * p, : nW * p].astype(compute_dtype)
    patches = xb.reshape(B, C, nH, p, nW, p)
    patches = jnp.transpose(patches, (0, 2, 4, 1, 3, 5))
    x2d = patches.reshape(M, K)                                  # (M, K)

    # Pad K to the lane-dense 128 multiple; pad M only to the 8-row sublane
    # (NOT to a multiple of tm) -- the grid's last block is a partial block
    # that Pallas masks on store.
    Mp = _round_up(M, 8)
    x2d = jnp.pad(x2d, ((0, Mp - M), (0, Kp - K)))

    tm, tile_bytes = _choose_tm(Mp, Kp, Ep, x2d.dtype.itemsize,
                                w_packed.dtype.itemsize)
    grid_m = pl.cdiv(Mp, tm)

    # Generation-aware-ish VMEM limit: actual tile bytes + headroom, clamped
    # to stay inside v7x's 64 MiB physical VMEM.
    vmem_limit = int(min(max(2 * tile_bytes, 32 * 1024 * 1024),
                         48 * 1024 * 1024))

    out_padded = pl.pallas_call(
        _proj_kernel,
        out_shape=jax.ShapeDtypeStruct((Mp, Ep), jnp.float32),
        grid_spec=pltpu.PrefetchScalarGridSpec(
            num_scalar_prefetch=0,
            grid=(grid_m,),
            in_specs=[
                pl.BlockSpec((tm, Kp), lambda i: (i, 0)),        # streamed rows
                # TODO(synk): at ViT-scale weights, single-buffer the
                # grid-invariant W/b via pipeline_mode=pl.Buffered(1) to free
                # VMEM on v7x (negligible at Kp=Ep=128).
                pl.BlockSpec((Kp, Ep), lambda i: (0, 0)),        # resident W
                pl.BlockSpec((1, Ep), lambda i: (0, 0)),         # resident bias
            ],
            out_specs=pl.BlockSpec((tm, Ep), lambda i: (i, 0)),
        ),
        compiler_params=pltpu.CompilerParams(
            dimension_semantics=("parallel",),                   # dual-TC on v7x
            vmem_limit_bytes=vmem_limit,
        ),
    )(x2d, w_packed, b_packed)

    # Slice padding away (identity / fused under jit when no padding was
    # needed).  Output stays f32 -- the module's parameter dtype -- and is
    # intentionally NOT tied to x.dtype.
    out = out_padded[:M, :emb_size]
    return out.reshape(B, N, emb_size)


if __name__ == "__main__":
    # Small shapes consistent with the module defaults:
    # in_channels=4, patch_size=5, emb_size=16, spatial 16x16 -> 3x3=9 patches
    # (the 16-mod-5 remainder is dropped, matching torch.unfold).
    B, C, H, W = 2, 4, 16, 16
    patch_size = 5
    emb_size = 16
    in_features = C * patch_size * patch_size

    key = jax.random.PRNGKey(0)
    kx, kw, kb = jax.random.split(key, 3)
    x = jax.random.normal(kx, (B, C, H, W), dtype=jnp.float32)
    # nn.Linear param shapes: weight (emb, in_features), bias (emb,)
    weight = jax.random.normal(kw, (emb_size, in_features), dtype=jnp.float32) * 0.02
    bias = jax.random.normal(kb, (emb_size,), dtype=jnp.float32) * 0.02

    # Parameter packing hoisted out of the forward path (done once).
    w_packed, b_packed = pack_linear_params(weight, bias)

    out = patch_embedding_forward(x, w_packed, b_packed,
                                  patch_size=patch_size, emb_size=emb_size)
    out = jax.block_until_ready(out)

    # Reference in plain f32 JAX (same unfold/permute/Linear math).
    nH, nW = H // patch_size, W // patch_size
    xc = x[:, :, : nH * patch_size, : nW * patch_size]
    ref = xc.reshape(B, C, nH, patch_size, nW, patch_size)
    ref = jnp.transpose(ref, (0, 2, 4, 1, 3, 5)).reshape(B, -1, in_features)
    ref = ref @ weight.T + bias

    assert out.shape == (B, nH * nW, emb_size), out.shape
    assert out.dtype == jnp.float32, out.dtype
    # bf16 operands (f32 accumulation) -> loosened tolerance vs f32 reference.
    max_err = float(jnp.max(jnp.abs(out - ref)))
    assert max_err < 2e-2, max_err

    print("KERNEL_OK")
</pallas_src>

<mosaic_0001>
module attributes {stable_mosaic.version = 11 : i64} {
  func.func @_proj_kernel(%arg0: i32, %arg1: memref<16x128xbf16, #tpu.memory_space<vmem>>, %arg2: memref<128x128xbf16, #tpu.memory_space<vmem>>, %arg3: memref<1x128xf32, #tpu.memory_space<vmem>>, %arg4: memref<16x128xf32, #tpu.memory_space<vmem>>) attributes {dimension_semantics = [#tpu.dimension_semantics<parallel>], iteration_bounds = array<i64: 2>, scalar_prefetch = 0 : i64, scratch_operands = 0 : i64, tpu.core_type = #tpu.core_type<tc>, window_params = [{transform_indices = @transform_0, window_bounds = array<i64: 16, 128>}, {pipeline_mode = #tpu.pipeline_mode<synchronous>, transform_indices = @transform_1, window_bounds = array<i64: 128, 128>}, {pipeline_mode = #tpu.pipeline_mode<synchronous>, transform_indices = @transform_2, window_bounds = array<i64: 1, 128>}, {transform_indices = @transform_3, window_bounds = array<i64: 16, 128>}]} {
    %c0 = arith.constant 0 : index
    %c0_0 = arith.constant 0 : index
    %0 = vector.load %arg1[%c0, %c0_0] : memref<16x128xbf16, #tpu.memory_space<vmem>>, vector<16x128xbf16>
    %c0_1 = arith.constant 0 : index
    %c0_2 = arith.constant 0 : index
    %1 = vector.load %arg2[%c0_1, %c0_2] : memref<128x128xbf16, #tpu.memory_space<vmem>>, vector<128x128xbf16>
    %cst = arith.constant dense<0.000000e+00> : vector<16x128xf32>
    %2 = tpu.matmul %0, %1, %cst {dimension_numbers = #tpu.dot_dimension_numbers<[1], [0], [0], [1], [0, 0, 1, 1], [], []>} : vector<16x128xbf16>, vector<128x128xbf16>, vector<16x128xf32> -> vector<16x128xf32>
    %c0_3 = arith.constant 0 : index
    %c0_4 = arith.constant 0 : index
    %3 = vector.load %arg3[%c0_3, %c0_4] : memref<1x128xf32, #tpu.memory_space<vmem>>, vector<1x128xf32>
    %4 = vector.broadcast %3 : vector<1x128xf32> to vector<16x128xf32>
    %5 = arith.addf %2, %4 : vector<16x128xf32>
    %c0_5 = arith.constant 0 : index
    %c0_6 = arith.constant 0 : index
    %6 = vector.load %arg4[%c0_5, %c0_6] : memref<16x128xf32, #tpu.memory_space<vmem>>, vector<16x128xf32>
    tpu.vector_store %arg4[%c0_5, %c0_6], %5 {strides = array<i32>} : memref<16x128xf32, #tpu.memory_space<vmem>>, vector<16x128xf32>,
    return
  }
  func.func @transform_0(%arg0: i32) -> (i32, i32) {
    %c0_i32 = arith.constant 0 : i32
    %c0_i32_0 = arith.constant 0 : i32
    return %arg0, %c0_i32 : i32, i32
  }
  func.func @transform_1(%arg0: i32) -> (i32, i32) {
    %c0_i32 = arith.constant 0 : i32
    %c0_i32_0 = arith.constant 0 : i32
    %c0_i32_1 = arith.constant 0 : i32
    return %c0_i32, %c0_i32_0 : i32, i32
  }
  func.func @transform_2(%arg0: i32) -> (i32, i32) {
    %c0_i32 = arith.constant 0 : i32
    %c0_i32_0 = arith.constant 0 : i32
    %c0_i32_1 = arith.constant 0 : i32
    return %c0_i32, %c0_i32_0 : i32, i32
  }
  func.func @transform_3(%arg0: i32) -> (i32, i32) {
    %c0_i32 = arith.constant 0 : i32
    %c0_i32_0 = arith.constant 0 : i32
    return %arg0, %c0_i32 : i32, i32
  }
}

</mosaic_0001>

<llo_original>
// kernel: patch_embedding_forward.1
$region0: #{patch_embedding_forward.1}
  #allocation0 [shape = 'u32[]', space=smem, size = 0x4, offset = 0x4, fixed_abs, tag = 'smem constant byte address 0x4 - core index']
  #allocation1 [shape = 'u32[144,128]{1,0:T(1,128)}', space=vmem, size = 0x12000, scoped, tag = 'internal scratch']
  %s0 = inlined_call_operand.vmem [shape: bf16[24,128], index: 0, kind: input, shape index: {}]
  %s1 = inlined_call_operand.vmem [shape: bf16[128,128], index: 1, kind: input, shape index: {}]
  %s2 = inlined_call_operand.vmem [shape: f32[1,128], index: 2, kind: input, shape index: {}]
  %s3 = inlined_call_operand.vmem [shape: f32[24,128], index: 3, kind: output, shape index: {}]
  %s4 = sld [smem:[#allocation0]]
  $region93: #{patch_embedding_forward.1} parent=0
    _
  %s6 = ssub.s32 1, %s4
  %s7 = scalar_select 0, %s6, %s4
  $region1: #{patch_embedding_forward.1} parent=0
    #allocation2 [shape = 'u8[16384]{0}', space=vmem, size = 0x4000, scoped, tag = 'output window, operand 0']
    loop: start=0, step=1, limit=4
    $region2: #{patch_embedding_forward.1} parent=1 // loop_pre_header
      _
    $region3: #{patch_embedding_forward.1} parent=1 // loop_header
      %s9 = sphi 0, %s13
      %p10 = scmp.ge.s32.totalorder %s9, 4
      %s19 = sphi 0, %s21
      %s22 = sphi 0, %s19
      %s23 = sphi 0, %s22
      %s39 = sphi 0, %s23
      %s43 = sphi 0, %s43
      %s45 = sphi 0, %s43
      %s46 = sphi 0, %s45
      %s60 = sphi 0, %s46
      %s64 = sphi 0, %s64
      %s66 = sphi 0, %s64
      %s67 = sphi 0, %s66
      %s81 = sphi 0, %s67
      %s87 = sphi 0, %s89
      %s90 = sphi 0, %s87
      %s91 = sphi 0, %s90
      %s107 = sphi 0, %s91
    $region4: #{patch_embedding_forward.1} parent=1 // loop_header_branch
      %12 = sbr.rel (%p10) target = $region8
    $region5: #{patch_embedding_forward.1} parent=1 // loop_body
      %s14 = ssub.s32 %s9, 1
      %s15 = ssub.s32 %s9, 2
      %s16 = sadd.s32 %s9, 1
      %s17 = ssub.s32 %s9, %s16
      %p18 = scmp.eq.s32.totalorder %s17, 0
      %s20 = sadd.s32 %s19, 1
      %s21 = scalar_select %p18, %s19, %s20
      %p24 = pneg %p18
      %p25 = scmp.eq.s32.totalorder %s9, 1
      %p26 = por %p24, %p25
      %p27 = scmp.ne.s32.totalorder %s19, %s22
      %p28 = scmp.eq.s32.totalorder %s9, 0
      %p29 = por %p27, %p28
      %p30 = scmp.ne.s32.totalorder %s19, %s22
      %p31 = scmp.eq.s32.totalorder %s14, 1
      %p32 = por %p30, %p31
      %p33 = scmp.ne.s32.totalorder %s22, %s23
      %p34 = scmp.eq.s32.totalorder %s14, 0
      %p35 = por %p33, %p34
      %p36 = scmp.ne.s32.totalorder %s22, %s23
      %p37 = scmp.eq.s32.totalorder %s15, 1
      %p38 = por %p36, %p37
      %p40 = scmp.ne.s32.totalorder %s23, %s39
      %p41 = scmp.eq.s32.totalorder %s15, 0
      %p42 = por %p40, %p41
      %s44 = sadd.s32 %s43, 1
      %p47 = scmp.eq.s32.totalorder %s9, 1
      %p48 = scmp.ne.s32.totalorder %s43, %s45
      %p49 = scmp.eq.s32.totalorder %s9, 0
      %p50 = por %p48, %p49
      %p51 = scmp.ne.s32.totalorder %s43, %s45
      %p52 = scmp.eq.s32.totalorder %s14, 1
      %p53 = por %p51, %p52
      %p54 = scmp.ne.s32.totalorder %s45, %s46
      %p55 = scmp.eq.s32.totalorder %s14, 0
      %p56 = por %p54, %p55
      %p57 = scmp.ne.s32.totalorder %s45, %s46
      %p58 = scmp.eq.s32.totalorder %s15, 1
      %p59 = por %p57, %p58
      %p61 = scmp.ne.s32.totalorder %s46, %s60
      %p62 = scmp.eq.s32.totalorder %s15, 0
      %p63 = por %p61, %p62
      %s65 = sadd.s32 %s64, 1
      %p68 = scmp.eq.s32.totalorder %s9, 1
      %p69 = scmp.ne.s32.totalorder %s64, %s66
      %p70 = scmp.eq.s32.totalorder %s9, 0
      %p71 = por %p69, %p70
      %p72 = scmp.ne.s32.totalorder %s64, %s66
      %p73 = scmp.eq.s32.totalorder %s14, 1
      %p74 = por %p72, %p73
      %p75 = scmp.ne.s32.totalorder %s66, %s67
      %p76 = scmp.eq.s32.totalorder %s14, 0
      %p77 = por %p75, %p76
      %p78 = scmp.ne.s32.totalorder %s66, %s67
      %p79 = scmp.eq.s32.totalorder %s15, 1
      %p80 = por %p78, %p79
      %p82 = scmp.ne.s32.totalorder %s67, %s81
      %p83 = scmp.eq.s32.totalorder %s15, 0
      %p84 = por %p82, %p83
      %s85 = ssub.s32 %s9, %s16
      %p86 = scmp.eq.s32.totalorder %s85, 0
      %s88 = sadd.s32 %s87, 1
      %s89 = scalar_select %p86, %s87, %s88
      %p92 = pneg %p86
      %p93 = scmp.eq.s32.totalorder %s9, 1
      %p94 = por %p92, %p93
      %p95 = scmp.ne.s32.totalorder %s87, %s90
      %p96 = scmp.eq.s32.totalorder %s9, 0
      %p97 = por %p95, %p96
      %p98 = scmp.ne.s32.totalorder %s87, %s90
      %p99 = scmp.eq.s32.totalorder %s14, 1
      %p100 = por %p98, %p99
      %p101 = scmp.ne.s32.totalorder %s90, %s91
      %p102 = scmp.eq.s32.totalorder %s14, 0
      %p103 = por %p101, %p102
      %p104 = scmp.ne.s32.totalorder %s90, %s91
      %p105 = scmp.eq.s32.totalorder %s15, 1
      %p106 = por %p104, %p105
      %p108 = scmp.ne.s32.totalorder %s91, %s107
      %p109 = scmp.eq.s32.totalorder %s15, 0
      %p110 = por %p108, %p109
      %p111 = scmp.le.s32.totalorder 1, %s9
      %p112 = scmp.lt.s32.totalorder %s9, 3
      %p113 = pnand %p111, %p112
      %p114 = pneg %p113
      // Predicated region
      $region9: #{patch_embedding_forward.1} parent=5 // pred_check
        _
      $region10: #{patch_embedding_forward.1} parent=5 // pred_check_branch
        %116 = sbr.rel (%p113) target = $region12
      $region11: #{patch_embedding_forward.1} parent=5 // pred_region
        %s117 = ssub.s32 %s9, 1
        // Predicated region
        $region13: #{patch_embedding_forward.1} parent=11 // pred_check
          %p118 = pneg %p56
        $region14: #{patch_embedding_forward.1} parent=11 // pred_check_branch
          %120 = sbr.rel (%p118) target = $region16
        $region15: #{patch_embedding_forward.1} parent=11 // pred_region
          _
        $region16: #{patch_embedding_forward.1} parent=11 // pred_fallthru
          _
        // Predicated region
        $region17: #{patch_embedding_forward.1} parent=11 // pred_check
          %p121 = pneg %p77
        $region18: #{patch_embedding_forward.1} parent=11 // pred_check_branch
          %123 = sbr.rel (%p121) target = $region20
        $region19: #{patch_embedding_forward.1} parent=11 // pred_region
          _
        $region20: #{patch_embedding_forward.1} parent=11 // pred_fallthru
          _
      $region12: #{patch_embedding_forward.1} parent=5 // pred_fallthru
        _
      %p124 = scmp.lt.s32.totalorder %s9, 2
      // Predicated region
      $region21: #{patch_embedding_forward.1} parent=5 // pred_check
        %p125 = pneg %p124
      $region22: #{patch_embedding_forward.1} parent=5 // pred_check_branch
        %127 = sbr.rel (%p125) target = $region24
      $region23: #{patch_embedding_forward.1} parent=5 // pred_region
        // Predicated region
        $region25: #{patch_embedding_forward.1} parent=23 // pred_check
          %p128 = pneg %p29
        $region26: #{patch_embedding_forward.1} parent=23 // pred_check_branch
          %130 = sbr.rel (%p128) target = $region28
        $region27: #{patch_embedding_forward.1} parent=23 // pred_region
          %s131 = smul.u32 2, %s9
          %s132 = ssub.s32 3, %s131
          %p133 = scmp.lt.s32.totalorder %s132, 2
          %s134 = scalar_select %p133, %s132, 2
          %s135 = smul.u32 64, %s134
          %p136 = scmp.lt.s32.totalorder %s131, 2
          %s137 = scalar_select %p136, %s131, 2
          %s138 = smul.addr %s137, 4
          %s139 = scalar_lea.vmem %s0, %s138
          %s140 = smul.u32 2, %s9
          %s141 = ssub.s32 3, %s140
          %p142 = scmp.lt.s32.totalorder %s141, 2
          %s143 = scalar_select %p142, %s141, 2
          %s144 = smul.u32 64, %s143
        $region28: #{patch_embedding_forward.1} parent=23 // pred_fallthru
          _
      $region24: #{patch_embedding_forward.1} parent=5 // pred_fallthru
        _
      %p145 = scmp.le.s32.totalorder 1, %s9
      %p146 = scmp.lt.s32.totalorder %s9, 3
      %p147 = pnand %p145, %p146
      %p148 = pneg %p147
      // Predicated region
      $region29: #{patch_embedding_forward.1} parent=5 // pred_check
        _
      $region30: #{patch_embedding_forward.1} parent=5 // pred_check_branch
        %150 = sbr.rel (%p147) target = $region32
      $region31: #{patch_embedding_forward.1} parent=5 // pred_region
        %s151 = ssub.s32 %s9, 1
        %s152 = smul.u32 2, %s14
        %s153 = ssub.s32 3, %s152
        %p154 = scmp.lt.s32.totalorder %s153, 2
        %s155 = scalar_select %p154, %s153, 2
        %s156 = smul.u32 64, %s155
        %p157 = scmp.lt.s32.totalorder %s152, 2
        %s158 = scalar_select %p157, %s152, 2
        %s159 = smul.addr %s158, 4
        %s160 = scalar_lea.vmem %s0, %s159
        %p161 = pneg %p35
        %p162 = pneg %p32
        %p163 = pneg %p56
        %p164 = pneg %p53
        %p165 = pneg %p77
        %p166 = pneg %p74
        %p167 = pneg %p103
        %p168 = pneg %p100
        %s169 = sand.u32 %s90, 1
        %s170 = sand.u32 %s90, 1
        %s171 = smul.addr %s170, 16
        %s172 = scalar_lea.vmem [#allocation2], %s171
        %s173 = smul.u32 2, %s14
        %s174 = ssub.s32 3, %s173
        %p175 = scmp.lt.s32.totalorder %s174, 2
        %s176 = scalar_select %p175, %s174, 2
        %s177 = smul.u32 64, %s176
        %p178 = scmp.lt.s32.totalorder %s173, 2
        %s179 = scalar_select %p178, %s173, 2
        %s180 = smul.addr %s179, 4
        %s181 = scalar_lea.vmem %s0, %s180
        %s182 = smul.u32 2, %s14
        %s183 = ssub.s32 3, %s182
        %p184 = scmp.lt.s32.totalorder %s183, 2
        %s185 = scalar_select %p184, %s183, 2
        %s186 = smul.u32 64, %s185
        %s187 = smul.u32 2, %s14
        %s188 = ssub.s32 3, %s187
        %p189 = scmp.lt.s32.totalorder %s188, 2
        %s190 = scalar_select %p189, %s188, 2
        %s191 = smul.u32 128, %s190
        %v193 = vld [vmem:[%s181] sm:$0xf]
        %v194 = vld [vmem:[%s181 + $0x4] sm:$0xf]
        %v195 = vld [vmem:[%s1] sm:$0xf]
        %v196 = vld [vmem:[%s1 + $0x4] sm:$0xf]
        %v197 = vld [vmem:[%s1 + $0x8] sm:$0xf]
        %v198 = vld [vmem:[%s1 + $0xc] sm:$0xf]
        %v199 = vld [vmem:[%s1 + $0x10] sm:$0xf]
        %v200 = vld [vmem:[%s1 + $0x14] sm:$0xf]
        %v201 = vld [vmem:[%s1 + $0x18] sm:$0xf]
        %v202 = vld [vmem:[%s1 + $0x1c] sm:$0xf]
        %v203 = vld [vmem:[%s1 + $0x20] sm:$0xf]
        %v204 = vld [vmem:[%s1 + $0x24] sm:$0xf]
        %v205 = vld [vmem:[%s1 + $0x28] sm:$0xf]
        %v206 = vld [vmem:[%s1 + $0x2c] sm:$0xf]
        %v207 = vld [vmem:[%s1 + $0x30] sm:$0xf]
        %v208 = vld [vmem:[%s1 + $0x34] sm:$0xf]
        %v209 = vld [vmem:[%s1 + $0x38] sm:$0xf]
        %v210 = vld [vmem:[%s1 + $0x3c] sm:$0xf]
        %v211 = vld [vmem:[%s2] sm:$0x1]
        %v213 = vlaneseq
        %v214 = vshrl.u32 %v213, 7
        %v215 = vsub.s32 0, %v214
        %v216 = vrot.slane %v211, %v215
        %v220 = vunpack.c.l.b16 %v193
        %v221 = vunpack.c.l.b16 %v194
        %v222 = vpack.c.b16 %v221, %v220
        %v240 = vunpack.c.l.b16 %v195
        %v241 = vunpack.c.l.b16 %v196
        %v242 = vunpack.c.l.b16 %v197
        %v243 = vunpack.c.l.b16 %v198
        %v244 = vunpack.c.l.b16 %v199
        %v245 = vunpack.c.l.b16 %v200
        %v246 = vunpack.c.l.b16 %v201
        %v247 = vunpack.c.l.b16 %v202
        %v248 = vunpack.c.l.b16 %v203
        %v249 = vunpack.c.l.b16 %v204
        %v250 = vunpack.c.l.b16 %v205
        %v251 = vunpack.c.l.b16 %v206
        %v252 = vunpack.c.l.b16 %v207
        %v253 = vunpack.c.l.b16 %v208
        %v254 = vunpack.c.l.b16 %v209
        %v255 = vunpack.c.l.b16 %v210
        %v256 = vpack.c.b16 %v241, %v240
        %v257 = vpack.c.b16 %v243, %v242
        %v258 = vpack.c.b16 %v245, %v244
        %v259 = vpack.c.b16 %v247, %v246
        %v260 = vpack.c.b16 %v249, %v248
        %v261 = vpack.c.b16 %v251, %v250
        %v262 = vpack.c.b16 %v253, %v252
        %v263 = vpack.c.b16 %v255, %v254
        %272 = vmatprep.subr.bf16.mxu0 0
        %273 = vmatpush1.bf16.msra.mxu0 %v256
        %274 = vmatprep.subr.bf16.mxu0 0
        %275 = vmatpush1.bf16.msra.mxu0 %v257
        %276 = vmatprep.subr.bf16.mxu0 0
        %277 = vmatpush1.bf16.msra.mxu0 %v258
        %278 = vmatprep.subr.bf16.mxu0 0
        %279 = vmatpush1.bf16.msra.mxu0 %v259
        %280 = vmatprep.subr.bf16.mxu0 0
        %281 = vmatpush1.bf16.msra.mxu0 %v260
        %282 = vmatprep.subr.bf16.mxu0 0
        %283 = vmatpush1.bf16.msra.mxu0 %v261
        %284 = vmatprep.subr.bf16.mxu0 0
        %285 = vmatpush1.bf16.msra.mxu0 %v262
        %286 = vmatprep.subr.bf16.mxu0 0
        %287 = vmatpush1.bf16.msra.mxu0 %v263
        %288 = vmatprep.subr.bf16.mxu0 0
        %289 = vmatpush1.bf16.msra.mxu0 0
        %290 = vmatprep.subr.bf16.mxu0 0
        %291 = vmatpush1.bf16.msra.mxu0 0
        %292 = vmatprep.subr.bf16.mxu0 0
        %293 = vmatpush1.bf16.msra.mxu0 0
        %294 = vmatprep.subr.bf16.mxu0 0
        %295 = vmatpush1.bf16.msra.mxu0 0
        %296 = vmatprep.subr.bf16.mxu0 0
        %297 = vmatpush1.bf16.msra.mxu0 0
        %298 = vmatprep.subr.bf16.mxu0 0
        %299 = vmatpush1.bf16.msra.mxu0 0
        %300 = vmatprep.subr.bf16.mxu0 0
        %301 = vmatpush1.bf16.msra.mxu0 0
        %302 = vmatprep.subr.bf16.mxu0 0
        %303 = vmatpush1.bf16.msra.mxu0 0
        %304 = vmatprep.mubr.bf16.mxu0 0
        %305 = vmatmul.mubr.bf16.gmra.mrb[0].mxu0 %v222
        %v306 = vpop.f32.mrb[0].mxu0
        %v307 = vadd.f32 %v216, %v306
        %v308 = vpop.f32.mrb[0].mxu0
        %v309 = vpop.f32.mrb[0].mxu0
        %v310 = vadd.f32 %v216, %v309
        %v311 = vpop.f32.mrb[0].mxu0
        %312 = vdwg.mxu0
        %313 = vst [vmem:[%s172] sm:$0xff] %v307
        %314 = vst [vmem:[%s172 + $0x8] sm:$0xff] %v310
        %s315 = sand.u32 %s90, 1
        %s316 = sand.u32 %s90, 1
        %s317 = smul.addr %s316, 16
        %s318 = scalar_lea.vmem [#allocation2], %s317
        // Predicated region
        $region33: #{patch_embedding_forward.1} parent=31 // pred_check
          %p319 = pneg %p100
        $region34: #{patch_embedding_forward.1} parent=31 // pred_check_branch
          %321 = sbr.rel (%p319) target = $region36
        $region35: #{patch_embedding_forward.1} parent=31 // pred_region
          %s322 = smul.u32 2, %s14
          %s323 = ssub.s32 3, %s322
          %p324 = scmp.lt.s32.totalorder %s323, 2
          %s325 = scalar_select %p324, %s323, 2
          %s326 = smul.u32 128, %s325
          %p327 = scmp.ne.s32.totalorder 0, %s326
          %s328 = smul.addr %s322, 8
          %s329 = scalar_lea.vmem %s3, %s328
          // Predicated region
          $region37: #{patch_embedding_forward.1} parent=35 // pred_check
            %p330 = pneg %p327
          $region38: #{patch_embedding_forward.1} parent=35 // pred_check_branch
            %332 = sbr.rel (%p330) target = $region40
          $region39: #{patch_embedding_forward.1} parent=35 // pred_region
            // Predicated region
            $region41: #{patch_embedding_forward.1} parent=39 // pred_check
              _
            $region42: #{patch_embedding_forward.1} parent=39 // pred_check_branch
              %334 = sbr.rel (0) target = $region44
            $region43: #{patch_embedding_forward.1} parent=39 // pred_region
              // Predicated region
              $region63: #{patch_embedding_forward.1} parent=43 // pred_check
                _
              $region64: #{patch_embedding_forward.1} parent=43 // pred_check_branch
                %385 = sbr.rel (0) target = $region66
              $region65: #{patch_embedding_forward.1} parent=43 // pred_region
                %s386 = sshrl.u32 %s325, 1
                // While loop
                $region67: #{patch_embedding_forward.1} parent=65 // loop_pre_header
                  _
                $region68: #{patch_embedding_forward.1} parent=65 // loop_header
                  %s388 = sphi 0, %s390
                  %p389 = scmp.ge.s32.totalorder %s388, %s386
                  %s393 = sphi 0, %s402
                  %s394 = sphi %s318, %s405
                  %s395 = sphi %s329, %s406
                $region69: #{patch_embedding_forward.1} parent=65 // loop_header_branch
                  %392 = sbr.rel (%p389) target = $region73
                $region70: #{patch_embedding_forward.1} parent=65 // loop_body
                  %v396 = vld [vmem:[%s394] sm:$0xff]
                  %397 = vst [vmem:[%s395] sm:$0xff] %v396
                  %v398 = vld [vmem:[%s394 + $0x8] sm:$0xff]
                  %399 = vst [vmem:[%s395 + $0x8] sm:$0xff] %v398
                  %s400 = sadd.s32 1, %s393
                  %p401 = scmp.ge.s32.totalorder %s400, %s386
                  %s402 = scalar_select %p401, 0, %s400
                  %s403 = smul.u32 %s402, 16
                  %s404 = smul.u32 %s402, 16
                  %s405 = scalar_lea.vmem %s318, %s403 [#allocation2]
                  %s406 = scalar_lea.vmem %s329, %s404
                $region71: #{patch_embedding_forward.1} parent=65 // loop_footer
                  %s390 = sadd.s32 %s388, 1
                $region72: #{patch_embedding_forward.1} parent=65 // loop_footer_branch
                  %387 = sbr.rel target = $region68
                $region73: #{patch_embedding_forward.1} parent=65 // loop_exit
                  _
                %s407 = sshrl.u32 %s325, 1
                %s408 = sand.u32 %s325, 1
                %s409 = smul.u32 %s407, 2
                %s410 = smul.u32 8, %s409
                %s411 = scalar_lea.vmem %s318, %s410 [#allocation2]
                %s412 = smul.u32 8, %s409
                %s413 = scalar_lea.vmem %s329, %s412
                // While loop
                $region74: #{patch_embedding_forward.1} parent=65 // loop_pre_header
                  _
                $region75: #{patch_embedding_forward.1} parent=65 // loop_header
                  %s415 = sphi 0, %s417
                  %p416 = scmp.ge.s32.totalorder %s415, %s408
                  %s420 = sphi 0, %s427
                  %s421 = sphi %s411, %s430
                  %s422 = sphi %s413, %s431
                $region76: #{patch_embedding_forward.1} parent=65 // loop_header_branch
                  %419 = sbr.rel (%p416) target = $region80
                $region77: #{patch_embedding_forward.1} parent=65 // loop_body
                  %v423 = vld [vmem:[%s421] sm:$0xff]
                  %424 = vst [vmem:[%s422] sm:$0xff] %v423
                  %s425 = sadd.s32 1, %s420
                  %p426 = scmp.ge.s32.totalorder %s425, %s408
                  %s427 = scalar_select %p426, 0, %s425
                  %s428 = smul.u32 %s427, 8
                  %s429 = smul.u32 %s427, 8
                  %s430 = scalar_lea.vmem %s411, %s428 [#allocation2]
                  %s431 = scalar_lea.vmem %s413, %s429
                $region78: #{patch_embedding_forward.1} parent=65 // loop_footer
                  %s417 = sadd.s32 %s415, 1
                $region79: #{patch_embedding_forward.1} parent=65 // loop_footer_branch
                  %414 = sbr.rel target = $region75
                $region80: #{patch_embedding_forward.1} parent=65 // loop_exit
                  _
              $region66: #{patch_embedding_forward.1} parent=43 // pred_fallthru
                _
              // Predicated region
              $region81: #{patch_embedding_forward.1} parent=43 // pred_check
                _
              $region82: #{patch_embedding_forward.1} parent=43 // pred_check_branch
                %433 = sbr.rel target = $region84
              $region83: #{patch_embedding_forward.1} parent=43 // pred_region
                _
              $region84: #{patch_embedding_forward.1} parent=43 // pred_fallthru
                _
            $region44: #{patch_embedding_forward.1} parent=39 // pred_fallthru
              _
            // Predicated region
            $region45: #{patch_embedding_forward.1} parent=39 // pred_check
              _
            $region46: #{patch_embedding_forward.1} parent=39 // pred_check_branch
              %336 = sbr.rel target = $region48
            $region47: #{patch_embedding_forward.1} parent=39 // pred_region
              %s338 = sshrl.u32 %s325, 1
              // While loop
              $region49: #{patch_embedding_forward.1} parent=47 // loop_pre_header
                _
              $region50: #{patch_embedding_forward.1} parent=47 // loop_header
                %s340 = sphi 0, %s342
                %p341 = scmp.ge.s32.totalorder %s340, %s338
                %s345 = sphi 0, %s354
                %s346 = sphi %s318, %s357
                %s347 = sphi %s329, %s358
              $region51: #{patch_embedding_forward.1} parent=47 // loop_header_branch
                %344 = sbr.rel (%p341) target = $region55
              $region52: #{patch_embedding_forward.1} parent=47 // loop_body
                %v348 = vld [vmem:[%s346] sm:$0xff]
                %349 = vst [vmem:[%s347] sm:$0xff] %v348
                %v350 = vld [vmem:[%s346 + $0x8] sm:$0xff]
                %351 = vst [vmem:[%s347 + $0x8] sm:$0xff] %v350
                %s352 = sadd.s32 1, %s345
                %p353 = scmp.ge.s32.totalorder %s352, %s338
                %s354 = scalar_select %p353, 0, %s352
                %s355 = smul.u32 %s354, 16
                %s356 = smul.u32 %s354, 16
                %s357 = scalar_lea.vmem %s318, %s355 [#allocation2]
                %s358 = scalar_lea.vmem %s329, %s356
              $region53: #{patch_embedding_forward.1} parent=47 // loop_footer
                %s342 = sadd.s32 %s340, 1
              $region54: #{patch_embedding_forward.1} parent=47 // loop_footer_branch
                %339 = sbr.rel target = $region50
              $region55: #{patch_embedding_forward.1} parent=47 // loop_exit
                _
              %s359 = sshrl.u32 %s325, 1
              %s360 = sand.u32 %s325, 1
              %s361 = smul.u32 %s359, 2
              %s362 = smul.u32 8, %s361
              %s363 = scalar_lea.vmem %s318, %s362 [#allocation2]
              %s364 = smul.u32 8, %s361
              %s365 = scalar_lea.vmem %s329, %s364
              // While loop
              $region56: #{patch_embedding_forward.1} parent=47 // loop_pre_header
                _
              $region57: #{patch_embedding_forward.1} parent=47 // loop_header
                %s367 = sphi 0, %s369
                %p368 = scmp.ge.s32.totalorder %s367, %s360
                %s372 = sphi 0, %s379
                %s373 = sphi %s363, %s382
                %s374 = sphi %s365, %s383
              $region58: #{patch_embedding_forward.1} parent=47 // loop_header_branch
                %371 = sbr.rel (%p368) target = $region62
              $region59: #{patch_embedding_forward.1} parent=47 // loop_body
                %v375 = vld [vmem:[%s373] sm:$0xff]
                %376 = vst [vmem:[%s374] sm:$0xff] %v375
                %s377 = sadd.s32 1, %s372
                %p378 = scmp.ge.s32.totalorder %s377, %s360
                %s379 = scalar_select %p378, 0, %s377
                %s380 = smul.u32 %s379, 8
                %s381 = smul.u32 %s379, 8
                %s382 = scalar_lea.vmem %s363, %s380 [#allocation2]
                %s383 = scalar_lea.vmem %s365, %s381
              $region60: #{patch_embedding_forward.1} parent=47 // loop_footer
                %s369 = sadd.s32 %s367, 1
              $region61: #{patch_embedding_forward.1} parent=47 // loop_footer_branch
                %366 = sbr.rel target = $region57
              $region62: #{patch_embedding_forward.1} parent=47 // loop_exit
                _
            $region48: #{patch_embedding_forward.1} parent=39 // pred_fallthru
              _
          $region40: #{patch_embedding_forward.1} parent=35 // pred_fallthru
            _
          %434 = vnop
        $region36: #{patch_embedding_forward.1} parent=31 // pred_fallthru
          _
      $region32: #{patch_embedding_forward.1} parent=5 // pred_fallthru
        _
      %p435 = scmp.le.s32.totalorder 2, %s9
      // Predicated region
      $region85: #{patch_embedding_forward.1} parent=5 // pred_check
        %p436 = pneg %p435
      $region86: #{patch_embedding_forward.1} parent=5 // pred_check_branch
        %438 = sbr.rel (%p436) target = $region88
      $region87: #{patch_embedding_forward.1} parent=5 // pred_region
        %s439 = ssub.s32 %s9, 2
        // Predicated region
        $region89: #{patch_embedding_forward.1} parent=87 // pred_check
          %p440 = pneg %p106
        $region90: #{patch_embedding_forward.1} parent=87 // pred_check_branch
          %442 = sbr.rel (%p440) target = $region92
        $region91: #{patch_embedding_forward.1} parent=87 // pred_region
          %s443 = sand.u32 %s91, 1
          %s444 = sand.u32 %s91, 1
          %s445 = smul.addr %s444, 16
          %s446 = scalar_lea.vmem [#allocation2], %s445
        $region92: #{patch_embedding_forward.1} parent=87 // pred_fallthru
          _
      $region88: #{patch_embedding_forward.1} parent=5 // pred_fallthru
        _
    $region6: #{patch_embedding_forward.1} parent=1 // loop_footer
      %s13 = sadd.s32 1, %s9
    $region7: #{patch_embedding_forward.1} parent=1 // loop_footer_branch
      %8 = sbr.rel target = $region3
    $region8: #{patch_embedding_forward.1} parent=1 // loop_exit
      _

</llo_original>
